<compile_context>
chip_gen: v7x
topology: tpu7x:2x2x1
jax: 0.10.0
libtpu: 0.0.40
codegen_flags: <defaults>
</compile_context>

<pallas_src>
import functools

import jax
import jax.numpy as jnp
from jax import lax
from jax.experimental import pallas as pl
from jax.experimental.pallas import tpu as pltpu


def _conv3x3_kernel(x_ref, w_ref, b_ref, o_ref, *, n, cout, cin, kh, kw, h, w):
    # x_ref: (N*CIN, H*W)        f32 VMEM  row b*CIN+ci = flattened image x[b, ci]
    # w_ref: (N*COUT, CIN*KH*KW) f32 VMEM  row b*COUT+co, col ci*KH*KW+r*KW+c = weight[co,ci,r,c]
    # b_ref: (N*COUT, 1)         f32 VMEM  row b*COUT+co = bias[co]
    # o_ref: (N*COUT, H*W)       f32 VMEM  full-width slab; wrapper trims invalid edges
    hw = h * w
    nt = kh * kw
    ncout = n * cout
    max_off = (kh - 1) * w + (kw - 1)
    lane_pad = ((max_off + 127) // 128) * 128  # zero tail so every tap slice is in-bounds

    # Hoisted invariants (built once; JAX does not CSE broadcast_in_dim).
    wts = w_ref[...]                                                   # (N*COUT, CIN*KH*KW)
    row_idx = lax.broadcasted_iota(jnp.int32, (ncout, hw), 0)          # sublane-row index
    zero_tail = jnp.zeros((ncout, lane_pad), jnp.float32)

    partials = []
    for ci in range(cin):
        # Replicate channel-ci image of each batch across its COUT sublane rows:
        # xc_rep[b*COUT + co, :] = x[b, ci, :].  Built once per input channel
        # (sublane broadcasts + selects), not per tap.
        xc_rep = jnp.broadcast_to(x_ref[pl.ds(ci, 1)], (ncout, hw))
        for b in range(1, n):
            row = jnp.broadcast_to(x_ref[pl.ds(b * cin + ci, 1)], (ncout, hw))
            xc_rep = jnp.where(row_idx >= b * cout, row, xc_rep)

        # Zero-padded copy: tap (r, c) is the full-width slice starting at r*W+c.
        xc_pad = jnp.concatenate([xc_rep, zero_tail], axis=1)          # (N*COUT, H*W+pad)

        acc = None  # independent accumulation chain per input channel
        for t in range(nt):
            r, c = divmod(t, kw)
            off = r * w + c
            tap = xc_rep if off == 0 else xc_pad[:, off:off + hw]      # (N*COUT, H*W)
            col = ci * nt + t
            contrib = tap * wts[:, col:col + 1]                        # per-sublane weight
            acc = contrib if acc is None else acc + contrib
        partials.append(acc)

    out = partials[0]
    for p in partials[1:]:
        out = out + p
    out = out + b_ref[...]                                             # bias, lane-broadcast
    o_ref[...] = out.astype(o_ref.dtype)                               # single coalesced store


def conv2d_3x3_pallas(x, weight, bias):
    """x: (N, CIN, H, W) f32; weight: (COUT, CIN, KH, KW) f32; bias: (COUT,) f32."""
    n, cin, h, w = x.shape
    cout, cin_w, kh, kw = weight.shape
    assert cin == cin_w
    oh, ow = h - kh + 1, w - kw + 1
    hw = h * w

    # Free reshape (no transpose): NCHW -> (N*CIN, H*W), spatial axis on lanes.
    x_flat = x.reshape(n * cin, hw).astype(jnp.float32)

    # Tiny parameter repack (27 + 3 elements) matching the kernel's (N*COUT)-row packing.
    w_packed = jnp.tile(weight.reshape(cout, cin * kh * kw).astype(jnp.float32), (n, 1))
    b_packed = jnp.tile(bias.astype(jnp.float32), n).reshape(n * cout, 1)

    kernel = functools.partial(
        _conv3x3_kernel, n=n, cout=cout, cin=cin, kh=kh, kw=kw, h=h, w=w)

    out_flat = pl.pallas_call(
        kernel,
        out_shape=jax.ShapeDtypeStruct((n * cout, hw), jnp.float32),
        in_specs=[
            pl.BlockSpec(memory_space=pltpu.MemorySpace.VMEM),
            pl.BlockSpec(memory_space=pltpu.MemorySpace.VMEM),
            pl.BlockSpec(memory_space=pltpu.MemorySpace.VMEM),
        ],
        out_specs=pl.BlockSpec(memory_space=pltpu.MemorySpace.VMEM),
    )(x_flat, w_packed, b_packed)

    # Rows are already (b, co)-ordered -> free reshape, then trim the invalid
    # trailing KH-1 rows / KW-1 columns of the full-width slab.
    return out_flat.reshape(n, cout, h, w)[:, :, :oh, :ow]


def _reference_conv(x, weight, bias):
    out = lax.conv_general_dilated(
        x, weight,
        window_strides=(1, 1),
        padding="VALID",
        dimension_numbers=("NCHW", "OIHW", "NCHW"),
    )
    return out + bias[None, :, None, None]


if __name__ == "__main__":
    key = jax.random.PRNGKey(0)
    kx, kw_, kb = jax.random.split(key, 3)

    N, CIN, H, W = 2, 3, 16, 16
    COUT, KH, KW = 3, 3, 3

    # Deterministic parameter init (PyTorch-style uniform bound 1/sqrt(fan_in)).
    fan_in = CIN * KH * KW
    bound = 1.0 / (fan_in ** 0.5)
    weight = jax.random.uniform(kw_, (COUT, CIN, KH, KW), jnp.float32, -bound, bound)
    bias = jax.random.uniform(kb, (COUT,), jnp.float32, -bound, bound)

    x = jax.random.normal(kx, (N, CIN, H, W), jnp.float32)

    conv = jax.jit(conv2d_3x3_pallas)
    out = jax.block_until_ready(conv(x, weight, bias))

    ref = jax.block_until_ready(_reference_conv(x, weight, bias))
    assert out.shape == (N, COUT, H - 2, W - 2), out.shape
    assert jnp.allclose(out, ref, atol=1e-4, rtol=1e-4), "mismatch vs reference conv"

    print("KERNEL_OK")
</pallas_src>

<mosaic_0001>
module attributes {stable_mosaic.version = 11 : i64} {
  func.func @_conv3x3_kernel(%arg0: memref<6x256xf32, #tpu.memory_space<vmem>>, %arg1: memref<6x27xf32, #tpu.memory_space<vmem>>, %arg2: memref<6x1xf32, #tpu.memory_space<vmem>>, %arg3: memref<6x256xf32, #tpu.memory_space<vmem>>) attributes {dimension_semantics = [], scalar_prefetch = 0 : i64, scratch_operands = 0 : i64, tpu.core_type = #tpu.core_type<tc>} {
    %c0 = arith.constant 0 : index
    %c0_0 = arith.constant 0 : index
    %0 = vector.load %arg1[%c0, %c0_0] : memref<6x27xf32, #tpu.memory_space<vmem>>, vector<6x27xf32>
    %1 = tpu.iota {dimensions = array<i32: 0>} : vector<6x256xi32>
    %cst = arith.constant 0.000000e+00 : f32
    %2 = vector.broadcast %cst : f32 to vector<6x128xf32>
    %c0_1 = arith.constant 0 : index
    %c0_2 = arith.constant 0 : index
    %3 = vector.load %arg0[%c0_1, %c0_2] : memref<6x256xf32, #tpu.memory_space<vmem>>, vector<1x256xf32>
    %4 = vector.shape_cast %3 : vector<1x256xf32> to vector<1x256xf32>
    %5 = vector.broadcast %4 : vector<1x256xf32> to vector<6x256xf32>
    %c3 = arith.constant 3 : index
    %c0_3 = arith.constant 0 : index
    %6 = vector.load %arg0[%c3, %c0_3] : memref<6x256xf32, #tpu.memory_space<vmem>>, vector<1x256xf32>
    %7 = vector.shape_cast %6 : vector<1x256xf32> to vector<1x256xf32>
    %8 = vector.broadcast %7 : vector<1x256xf32> to vector<6x256xf32>
    %c3_i32 = arith.constant 3 : i32
    %9 = vector.broadcast %c3_i32 : i32 to vector<6x256xi32>
    %10 = arith.cmpi sge, %1, %9 : vector<6x256xi32>
    %11 = arith.select %10, %8, %5 : vector<6x256xi1>, vector<6x256xf32>
    %12 = tpu.concatenate %11, %2 in 1 : vector<6x256xf32>, vector<6x128xf32> -> vector<6x384xf32>
    %13 = vector.extract_strided_slice %0 {offsets = [0, 0], sizes = [6, 1], strides = [1, 1]} : vector<6x27xf32> to vector<6x1xf32>
    %14 = vector.broadcast %13 : vector<6x1xf32> to vector<6x256xf32>
    %15 = arith.mulf %11, %14 : vector<6x256xf32>
    %16 = vector.extract_strided_slice %12 {offsets = [0, 1], sizes = [6, 256], strides = [1, 1]} : vector<6x384xf32> to vector<6x256xf32>
    %17 = vector.extract_strided_slice %0 {offsets = [0, 1], sizes = [6, 1], strides = [1, 1]} : vector<6x27xf32> to vector<6x1xf32>
    %18 = vector.broadcast %17 : vector<6x1xf32> to vector<6x256xf32>
    %19 = arith.mulf %16, %18 : vector<6x256xf32>
    %20 = arith.addf %15, %19 : vector<6x256xf32>
    %21 = vector.extract_strided_slice %12 {offsets = [0, 2], sizes = [6, 256], strides = [1, 1]} : vector<6x384xf32> to vector<6x256xf32>
    %22 = vector.extract_strided_slice %0 {offsets = [0, 2], sizes = [6, 1], strides = [1, 1]} : vector<6x27xf32> to vector<6x1xf32>
    %23 = vector.broadcast %22 : vector<6x1xf32> to vector<6x256xf32>
    %24 = arith.mulf %21, %23 : vector<6x256xf32>
    %25 = arith.addf %20, %24 : vector<6x256xf32>
    %26 = vector.extract_strided_slice %12 {offsets = [0, 16], sizes = [6, 256], strides = [1, 1]} : vector<6x384xf32> to vector<6x256xf32>
    %27 = vector.extract_strided_slice %0 {offsets = [0, 3], sizes = [6, 1], strides = [1, 1]} : vector<6x27xf32> to vector<6x1xf32>
    %28 = vector.broadcast %27 : vector<6x1xf32> to vector<6x256xf32>
    %29 = arith.mulf %26, %28 : vector<6x256xf32>
    %30 = arith.addf %25, %29 : vector<6x256xf32>
    %31 = vector.extract_strided_slice %12 {offsets = [0, 17], sizes = [6, 256], strides = [1, 1]} : vector<6x384xf32> to vector<6x256xf32>
    %32 = vector.extract_strided_slice %0 {offsets = [0, 4], sizes = [6, 1], strides = [1, 1]} : vector<6x27xf32> to vector<6x1xf32>
    %33 = vector.broadcast %32 : vector<6x1xf32> to vector<6x256xf32>
    %34 = arith.mulf %31, %33 : vector<6x256xf32>
    %35 = arith.addf %30, %34 : vector<6x256xf32>
    %36 = vector.extract_strided_slice %12 {offsets = [0, 18], sizes = [6, 256], strides = [1, 1]} : vector<6x384xf32> to vector<6x256xf32>
    %37 = vector.extract_strided_slice %0 {offsets = [0, 5], sizes = [6, 1], strides = [1, 1]} : vector<6x27xf32> to vector<6x1xf32>
    %38 = vector.broadcast %37 : vector<6x1xf32> to vector<6x256xf32>
    %39 = arith.mulf %36, %38 : vector<6x256xf32>
    %40 = arith.addf %35, %39 : vector<6x256xf32>
    %41 = vector.extract_strided_slice %12 {offsets = [0, 32], sizes = [6, 256], strides = [1, 1]} : vector<6x384xf32> to vector<6x256xf32>
    %42 = vector.extract_strided_slice %0 {offsets = [0, 6], sizes = [6, 1], strides = [1, 1]} : vector<6x27xf32> to vector<6x1xf32>
    %43 = vector.broadcast %42 : vector<6x1xf32> to vector<6x256xf32>
    %44 = arith.mulf %41, %43 : vector<6x256xf32>
    %45 = arith.addf %40, %44 : vector<6x256xf32>
    %46 = vector.extract_strided_slice %12 {offsets = [0, 33], sizes = [6, 256], strides = [1, 1]} : vector<6x384xf32> to vector<6x256xf32>
    %47 = vector.extract_strided_slice %0 {offsets = [0, 7], sizes = [6, 1], strides = [1, 1]} : vector<6x27xf32> to vector<6x1xf32>
    %48 = vector.broadcast %47 : vector<6x1xf32> to vector<6x256xf32>
    %49 = arith.mulf %46, %48 : vector<6x256xf32>
    %50 = arith.addf %45, %49 : vector<6x256xf32>
    %51 = vector.extract_strided_slice %12 {offsets = [0, 34], sizes = [6, 256], strides = [1, 1]} : vector<6x384xf32> to vector<6x256xf32>
    %52 = vector.extract_strided_slice %0 {offsets = [0, 8], sizes = [6, 1], strides = [1, 1]} : vector<6x27xf32> to vector<6x1xf32>
    %53 = vector.broadcast %52 : vector<6x1xf32> to vector<6x256xf32>
    %54 = arith.mulf %51, %53 : vector<6x256xf32>
    %55 = arith.addf %50, %54 : vector<6x256xf32>
    %c1 = arith.constant 1 : index
    %c0_4 = arith.constant 0 : index
    %56 = vector.load %arg0[%c1, %c0_4] : memref<6x256xf32, #tpu.memory_space<vmem>>, vector<1x256xf32>
    %57 = vector.shape_cast %56 : vector<1x256xf32> to vector<1x256xf32>
    %58 = vector.broadcast %57 : vector<1x256xf32> to vector<6x256xf32>
    %c4 = arith.constant 4 : index
    %c0_5 = arith.constant 0 : index
    %59 = vector.load %arg0[%c4, %c0_5] : memref<6x256xf32, #tpu.memory_space<vmem>>, vector<1x256xf32>
    %60 = vector.shape_cast %59 : vector<1x256xf32> to vector<1x256xf32>
    %61 = vector.broadcast %60 : vector<1x256xf32> to vector<6x256xf32>
    %c3_i32_6 = arith.constant 3 : i32
    %62 = vector.broadcast %c3_i32_6 : i32 to vector<6x256xi32>
    %63 = arith.cmpi sge, %1, %62 : vector<6x256xi32>
    %64 = arith.select %63, %61, %58 : vector<6x256xi1>, vector<6x256xf32>
    %65 = tpu.concatenate %64, %2 in 1 : vector<6x256xf32>, vector<6x128xf32> -> vector<6x384xf32>
    %66 = vector.extract_strided_slice %0 {offsets = [0, 9], sizes = [6, 1], strides = [1, 1]} : vector<6x27xf32> to vector<6x1xf32>
    %67 = vector.broadcast %66 : vector<6x1xf32> to vector<6x256xf32>
    %68 = arith.mulf %64, %67 : vector<6x256xf32>
    %69 = vector.extract_strided_slice %65 {offsets = [0, 1], sizes = [6, 256], strides = [1, 1]} : vector<6x384xf32> to vector<6x256xf32>
    %70 = vector.extract_strided_slice %0 {offsets = [0, 10], sizes = [6, 1], strides = [1, 1]} : vector<6x27xf32> to vector<6x1xf32>
    %71 = vector.broadcast %70 : vector<6x1xf32> to vector<6x256xf32>
    %72 = arith.mulf %69, %71 : vector<6x256xf32>
    %73 = arith.addf %68, %72 : vector<6x256xf32>
    %74 = vector.extract_strided_slice %65 {offsets = [0, 2], sizes = [6, 256], strides = [1, 1]} : vector<6x384xf32> to vector<6x256xf32>
    %75 = vector.extract_strided_slice %0 {offsets = [0, 11], sizes = [6, 1], strides = [1, 1]} : vector<6x27xf32> to vector<6x1xf32>
    %76 = vector.broadcast %75 : vector<6x1xf32> to vector<6x256xf32>
    %77 = arith.mulf %74, %76 : vector<6x256xf32>
    %78 = arith.addf %73, %77 : vector<6x256xf32>
    %79 = vector.extract_strided_slice %65 {offsets = [0, 16], sizes = [6, 256], strides = [1, 1]} : vector<6x384xf32> to vector<6x256xf32>
    %80 = vector.extract_strided_slice %0 {offsets = [0, 12], sizes = [6, 1], strides = [1, 1]} : vector<6x27xf32> to vector<6x1xf32>
    %81 = vector.broadcast %80 : vector<6x1xf32> to vector<6x256xf32>
    %82 = arith.mulf %79, %81 : vector<6x256xf32>
    %83 = arith.addf %78, %82 : vector<6x256xf32>
    %84 = vector.extract_strided_slice %65 {offsets = [0, 17], sizes = [6, 256], strides = [1, 1]} : vector<6x384xf32> to vector<6x256xf32>
    %85 = vector.extract_strided_slice %0 {offsets = [0, 13], sizes = [6, 1], strides = [1, 1]} : vector<6x27xf32> to vector<6x1xf32>
    %86 = vector.broadcast %85 : vector<6x1xf32> to vector<6x256xf32>
    %87 = arith.mulf %84, %86 : vector<6x256xf32>
    %88 = arith.addf %83, %87 : vector<6x256xf32>
    %89 = vector.extract_strided_slice %65 {offsets = [0, 18], sizes = [6, 256], strides = [1, 1]} : vector<6x384xf32> to vector<6x256xf32>
    %90 = vector.extract_strided_slice %0 {offsets = [0, 14], sizes = [6, 1], strides = [1, 1]} : vector<6x27xf32> to vector<6x1xf32>
    %91 = vector.broadcast %90 : vector<6x1xf32> to vector<6x256xf32>
    %92 = arith.mulf %89, %91 : vector<6x256xf32>
    %93 = arith.addf %88, %92 : vector<6x256xf32>
    %94 = vector.extract_strided_slice %65 {offsets = [0, 32], sizes = [6, 256], strides = [1, 1]} : vector<6x384xf32> to vector<6x256xf32>
    %95 = vector.extract_strided_slice %0 {offsets = [0, 15], sizes = [6, 1], strides = [1, 1]} : vector<6x27xf32> to vector<6x1xf32>
    %96 = vector.broadcast %95 : vector<6x1xf32> to vector<6x256xf32>
    %97 = arith.mulf %94, %96 : vector<6x256xf32>
    %98 = arith.addf %93, %97 : vector<6x256xf32>
    %99 = vector.extract_strided_slice %65 {offsets = [0, 33], sizes = [6, 256], strides = [1, 1]} : vector<6x384xf32> to vector<6x256xf32>
    %100 = vector.extract_strided_slice %0 {offsets = [0, 16], sizes = [6, 1], strides = [1, 1]} : vector<6x27xf32> to vector<6x1xf32>
    %101 = vector.broadcast %100 : vector<6x1xf32> to vector<6x256xf32>
    %102 = arith.mulf %99, %101 : vector<6x256xf32>
    %103 = arith.addf %98, %102 : vector<6x256xf32>
    %104 = vector.extract_strided_slice %65 {offsets = [0, 34], sizes = [6, 256], strides = [1, 1]} : vector<6x384xf32> to vector<6x256xf32>
    %105 = vector.extract_strided_slice %0 {offsets = [0, 17], sizes = [6, 1], strides = [1, 1]} : vector<6x27xf32> to vector<6x1xf32>
    %106 = vector.broadcast %105 : vector<6x1xf32> to vector<6x256xf32>
    %107 = arith.mulf %104, %106 : vector<6x256xf32>
    %108 = arith.addf %103, %107 : vector<6x256xf32>
    %c2 = arith.constant 2 : index
    %c0_7 = arith.constant 0 : index
    %109 = vector.load %arg0[%c2, %c0_7] : memref<6x256xf32, #tpu.memory_space<vmem>>, vector<1x256xf32>
    %110 = vector.shape_cast %109 : vector<1x256xf32> to vector<1x256xf32>
    %111 = vector.broadcast %110 : vector<1x256xf32> to vector<6x256xf32>
    %c5 = arith.constant 5 : index
    %c0_8 = arith.constant 0 : index
    %112 = vector.load %arg0[%c5, %c0_8] : memref<6x256xf32, #tpu.memory_space<vmem>>, vector<1x256xf32>
    %113 = vector.shape_cast %112 : vector<1x256xf32> to vector<1x256xf32>
    %114 = vector.broadcast %113 : vector<1x256xf32> to vector<6x256xf32>
    %c3_i32_9 = arith.constant 3 : i32
    %115 = vector.broadcast %c3_i32_9 : i32 to vector<6x256xi32>
    %116 = arith.cmpi sge, %1, %115 : vector<6x256xi32>
    %117 = arith.select %116, %114, %111 : vector<6x256xi1>, vector<6x256xf32>
    %118 = tpu.concatenate %117, %2 in 1 : vector<6x256xf32>, vector<6x128xf32> -> vector<6x384xf32>
    %119 = vector.extract_strided_slice %0 {offsets = [0, 18], sizes = [6, 1], strides = [1, 1]} : vector<6x27xf32> to vector<6x1xf32>
    %120 = vector.broadcast %119 : vector<6x1xf32> to vector<6x256xf32>
    %121 = arith.mulf %117, %120 : vector<6x256xf32>
    %122 = vector.extract_strided_slice %118 {offsets = [0, 1], sizes = [6, 256], strides = [1, 1]} : vector<6x384xf32> to vector<6x256xf32>
    %123 = vector.extract_strided_slice %0 {offsets = [0, 19], sizes = [6, 1], strides = [1, 1]} : vector<6x27xf32> to vector<6x1xf32>
    %124 = vector.broadcast %123 : vector<6x1xf32> to vector<6x256xf32>
    %125 = arith.mulf %122, %124 : vector<6x256xf32>
    %126 = arith.addf %121, %125 : vector<6x256xf32>
    %127 = vector.extract_strided_slice %118 {offsets = [0, 2], sizes = [6, 256], strides = [1, 1]} : vector<6x384xf32> to vector<6x256xf32>
    %128 = vector.extract_strided_slice %0 {offsets = [0, 20], sizes = [6, 1], strides = [1, 1]} : vector<6x27xf32> to vector<6x1xf32>
    %129 = vector.broadcast %128 : vector<6x1xf32> to vector<6x256xf32>
    %130 = arith.mulf %127, %129 : vector<6x256xf32>
    %131 = arith.addf %126, %130 : vector<6x256xf32>
    %132 = vector.extract_strided_slice %118 {offsets = [0, 16], sizes = [6, 256], strides = [1, 1]} : vector<6x384xf32> to vector<6x256xf32>
    %133 = vector.extract_strided_slice %0 {offsets = [0, 21], sizes = [6, 1], strides = [1, 1]} : vector<6x27xf32> to vector<6x1xf32>
    %134 = vector.broadcast %133 : vector<6x1xf32> to vector<6x256xf32>
    %135 = arith.mulf %132, %134 : vector<6x256xf32>
    %136 = arith.addf %131, %135 : vector<6x256xf32>
    %137 = vector.extract_strided_slice %118 {offsets = [0, 17], sizes = [6, 256], strides = [1, 1]} : vector<6x384xf32> to vector<6x256xf32>
    %138 = vector.extract_strided_slice %0 {offsets = [0, 22], sizes = [6, 1], strides = [1, 1]} : vector<6x27xf32> to vector<6x1xf32>
    %139 = vector.broadcast %138 : vector<6x1xf32> to vector<6x256xf32>
    %140 = arith.mulf %137, %139 : vector<6x256xf32>
    %141 = arith.addf %136, %140 : vector<6x256xf32>
    %142 = vector.extract_strided_slice %118 {offsets = [0, 18], sizes = [6, 256], strides = [1, 1]} : vector<6x384xf32> to vector<6x256xf32>
    %143 = vector.extract_strided_slice %0 {offsets = [0, 23], sizes = [6, 1], strides = [1, 1]} : vector<6x27xf32> to vector<6x1xf32>
    %144 = vector.broadcast %143 : vector<6x1xf32> to vector<6x256xf32>
    %145 = arith.mulf %142, %144 : vector<6x256xf32>
    %146 = arith.addf %141, %145 : vector<6x256xf32>
    %147 = vector.extract_strided_slice %118 {offsets = [0, 32], sizes = [6, 256], strides = [1, 1]} : vector<6x384xf32> to vector<6x256xf32>
    %148 = vector.extract_strided_slice %0 {offsets = [0, 24], sizes = [6, 1], strides = [1, 1]} : vector<6x27xf32> to vector<6x1xf32>
    %149 = vector.broadcast %148 : vector<6x1xf32> to vector<6x256xf32>
    %150 = arith.mulf %147, %149 : vector<6x256xf32>
    %151 = arith.addf %146, %150 : vector<6x256xf32>
    %152 = vector.extract_strided_slice %118 {offsets = [0, 33], sizes = [6, 256], strides = [1, 1]} : vector<6x384xf32> to vector<6x256xf32>
    %153 = vector.extract_strided_slice %0 {offsets = [0, 25], sizes = [6, 1], strides = [1, 1]} : vector<6x27xf32> to vector<6x1xf32>
    %154 = vector.broadcast %153 : vector<6x1xf32> to vector<6x256xf32>
    %155 = arith.mulf %152, %154 : vector<6x256xf32>
    %156 = arith.addf %151, %155 : vector<6x256xf32>
    %157 = vector.extract_strided_slice %118 {offsets = [0, 34], sizes = [6, 256], strides = [1, 1]} : vector<6x384xf32> to vector<6x256xf32>
    %158 = vector.extract_strided_slice %0 {offsets = [0, 26], sizes = [6, 1], strides = [1, 1]} : vector<6x27xf32> to vector<6x1xf32>
    %159 = vector.broadcast %158 : vector<6x1xf32> to vector<6x256xf32>
    %160 = arith.mulf %157, %159 : vector<6x256xf32>
    %161 = arith.addf %156, %160 : vector<6x256xf32>
    %162 = arith.addf %55, %108 : vector<6x256xf32>
    %163 = arith.addf %162, %161 : vector<6x256xf32>
    %c0_10 = arith.constant 0 : index
    %c0_11 = arith.constant 0 : index
    %164 = vector.load %arg2[%c0_10, %c0_11] : memref<6x1xf32, #tpu.memory_space<vmem>>, vector<6x1xf32>
    %165 = vector.broadcast %164 : vector<6x1xf32> to vector<6x256xf32>
    %166 = arith.addf %163, %165 : vector<6x256xf32>
    %c0_12 = arith.constant 0 : index
    %c0_13 = arith.constant 0 : index
    %167 = vector.load %arg3[%c0_12, %c0_13] : memref<6x256xf32, #tpu.memory_space<vmem>>, vector<6x256xf32>
    tpu.vector_store %arg3[%c0_12, %c0_13], %166 {strides = array<i32>} : memref<6x256xf32, #tpu.memory_space<vmem>>, vector<6x256xf32>,
    return
  }
}

</mosaic_0001>

<llo_original>
// kernel: tile.12
$region0: #{tile.12}
  %s0 = inlined_call_operand.vmem [shape: f32[2,3,27], index: 0, kind: input, shape index: {}]
  %s1 = inlined_call_operand.vmem [shape: f32[6,27], index: 1, kind: output, shape index: {}]
  $region1: #{tile.12} parent=0
    #allocation0 [shape = 'u8[8192]{0}', space=vmem, size = 0x2000, scoped, tag = 'scoped mem for input reshape']
    %s3 = sshllo.u32 0, 4
    %s4 = scalar_lea.vmem %s0, 4
    %v5 = vld [vmem:[%s4] sm:%s3]
    %s6 = scalar_lea.vmem [#allocation0], 8
    %7 = vst [vmem:[%s6] sm:%s3] %v5
    %v8 = vld [vmem:[%s0] sm:%s3]
    %9 = vst [vmem:[#allocation0] sm:%s3] %v8
    %v10 = vld [vmem:[#allocation0] sm:$0x7]
    %vm11 = vcmask 220160
    %12 = vst.msk [vmem:[%s1] sm:$0x7] %vm11, %v10
    %s13 = scalar_lea.vmem [#allocation0], 8
    %v14 = vld [vmem:[%s13] sm:$0x7]
    %vm15 = vcmask 220160
    %s16 = scalar_lea.vmem %s1, 3
    %17 = vst.msk [vmem:[%s16] sm:$0x7] %vm15, %v14

// kernel: tile.16
$region0: #{tile.16}
  #allocation0 [shape = 's32[1]{0}', space=sflag, size = 0x4, scoped, tag = 'scoped memory for tile.16']
  %s0 = inlined_call_operand.vmem [shape: f32[3], index: 0, kind: input, shape index: {}]
  %s1 = inlined_call_operand.vmem [shape: f32[2,3], index: 1, kind: output, shape index: {}]
  // Predicated region
  $region2: #{tile.16} parent=0 // pred_check
    _
  $region3: #{tile.16} parent=0 // pred_check_branch
    %3 = sbr.rel (0) target = $region5
  $region4: #{tile.16} parent=0 // pred_region
    _
  $region5: #{tile.16} parent=0 // pred_fallthru
    _
  %v4 = vld [vmem:[%s0] ss:$0 sm:$0xff]
  %5 = vst [vmem:[%s1] sm:$0x3] %v4

// kernel: tile.0
$region0: #{tile.0}
  %s0 = inlined_call_operand.vmem [shape: f32[2,3], index: 0, kind: input, shape index: {}]
  %s1 = inlined_call_operand.vmem [shape: f32[6,1], index: 1, kind: output, shape index: {}]
  $region1: #{tile.0} parent=0
    #allocation0 [shape = 'u8[4096]{0}', space=vmem, size = 0x1000, scoped, tag = 'scoped mem for input reshape']
    %s3 = sshllo.u32 0, 2
    %v4 = vld [vmem:[%s0] sm:%s3]
    %5 = vst [vmem:[#allocation0] sm:%s3] %v4
    %v6 = vld [vmem:[#allocation0] sm:$0x3]
    %vm7 = vcmask 7168
    %8 = vst.msk [vmem:[%s1] ss:$3 sm:$0x3] %vm7, %v6
    %v9 = vld [vmem:[#allocation0] sm:$0x3]
    %10 = vrot.lane.b32.xlu0 %v9, 127
    %v11 = vpop.permute.xlu0 %10
    %vm12 = vcmask 7168
    %s13 = scalar_lea.vmem %s1, 1
    %14 = vst.msk [vmem:[%s13] ss:$3 sm:$0x3] %vm12, %v11
    %v15 = vld [vmem:[#allocation0] sm:$0x3]
    %16 = vrot.lane.b32.xlu0 %v15, 126
    %v17 = vpop.permute.xlu0 %16
    %vm18 = vcmask 7168
    %s19 = scalar_lea.vmem %s1, 2
    %20 = vst.msk [vmem:[%s19] ss:$3 sm:$0x3] %vm18, %v17

// kernel: conv2d_3x3_pallas.1
$region0: #{conv2d_3x3_pallas.1}
  #allocation0 [shape = 'u32[]', space=smem, size = 0x4, offset = 0x4, fixed_abs, tag = 'smem constant byte address 0x4 - core index']
  #allocation1 [shape = 'u32[144,128]{1,0:T(1,128)}', space=vmem, size = 0x12000, scoped, tag = 'internal scratch']
  %s0 = inlined_call_operand.vmem [shape: f32[6,256], index: 0, kind: input, shape index: {}]
  %s1 = inlined_call_operand.vmem [shape: f32[6,27], index: 1, kind: input, shape index: {}]
  %s2 = inlined_call_operand.vmem [shape: f32[6,1], index: 2, kind: input, shape index: {}]
  %s3 = inlined_call_operand.vmem [shape: f32[6,256], index: 3, kind: output, shape index: {}]
  %s4 = sld [smem:[#allocation0]]
  $region22: #{conv2d_3x3_pallas.1} parent=0
    _
  %s6 = ssub.s32 1, %s4
  %s7 = scalar_select 0, %s6, %s4
  // Predicated region
  $region2: #{conv2d_3x3_pallas.1} parent=0 // pred_check
    _
  $region3: #{conv2d_3x3_pallas.1} parent=0 // pred_check_branch
    %9 = sbr.rel (0) target = $region5
  $region4: #{conv2d_3x3_pallas.1} parent=0 // pred_region
    _
  $region5: #{conv2d_3x3_pallas.1} parent=0 // pred_fallthru
    _
  // Predicated region
  $region6: #{conv2d_3x3_pallas.1} parent=0 // pred_check
    _
  $region7: #{conv2d_3x3_pallas.1} parent=0 // pred_check_branch
    %11 = sbr.rel (0) target = $region9
  $region8: #{conv2d_3x3_pallas.1} parent=0 // pred_region
    _
  $region9: #{conv2d_3x3_pallas.1} parent=0 // pred_fallthru
    _
  // Predicated region
  $region10: #{conv2d_3x3_pallas.1} parent=0 // pred_check
    _
  $region11: #{conv2d_3x3_pallas.1} parent=0 // pred_check_branch
    %13 = sbr.rel (0) target = $region13
  $region12: #{conv2d_3x3_pallas.1} parent=0 // pred_region
    _
  $region13: #{conv2d_3x3_pallas.1} parent=0 // pred_fallthru
    _
  %v14 = vld [vmem:[%s1] sm:$0x3f]
  %v15 = vlaneseq
  %v16 = vshrl.u32 %v15, 7
  %v17 = vld [vmem:[%s0] ss:$8 sm:$0x3]
  %v19 = vlaneseq
  %v20 = vshrl.u32 %v19, 7
  %v21 = vsub.s32 0, %v20
  %v22 = vrot.slane %v17, %v21
  %v23 = vlaneseq
  %v24 = vshrl.u32 %v23, 7
  %v25 = vsub.s32 1, %v24
  %v26 = vrot.slane %v17, %v25
  %s29 = scalar_lea.vmem %s0, 3
  %v30 = vld [vmem:[%s29] ss:$8 sm:$0x3]
  %v32 = vlaneseq
  %v33 = vshrl.u32 %v32, 7
  %v34 = vsub.s32 0, %v33
  %v35 = vrot.slane %v30, %v34
  %v36 = vlaneseq
  %v37 = vshrl.u32 %v36, 7
  %v38 = vsub.s32 1, %v37
  %v39 = vrot.slane %v30, %v38
  %vm42 = vcmp.ge.s32.totalorder %v16, 3
  %v43 = vsel %vm42, %v35, %v22
  %v44 = vsel %vm42, %v39, %v26
  %46 = vset.pattern.permute.xlu0 0
  %47 = vperm.xlu0 %46, %v14
  %v48 = vpop.permute.xlu0 %47
  %v50 = vmul.f32 %v43, %v48
  %v51 = vmul.f32 %v44, %v48
  %52 = vset.pattern.permute.xlu0 1
  %53 = vperm.xlu0 %52, %v14
  %v54 = vpop.permute.xlu0 %53
  %v56 = vmul.f32 %v43, %v54
  %v57 = vmul.f32 %v44, %v54
  %v58 = vmul.f32 %v54, 0.0
  %62 = vrot.lane.b32.xlu0 %v56, 127
  %v63 = vpop.permute.xlu0 %62
  %64 = vrot.lane.b32.xlu0 %v57, 127
  %v65 = vpop.permute.xlu0 %64
  %66 = vrot.lane.b32.xlu0 %v58, 127
  %v67 = vpop.permute.xlu0 %66
  %vm68 = vcmask 1039360
  %v69 = vsel %vm68, %v63, %v65
  %v70 = vsel %vm68, %v65, %v67
  %v73 = vadd.f32 %v50, %v69
  %v74 = vadd.f32 %v51, %v70
  %75 = vset.pattern.permute.xlu0 2
  %76 = vperm.xlu0 %75, %v14
  %v77 = vpop.permute.xlu0 %76
  %v79 = vmul.f32 %v43, %v77
  %v80 = vmul.f32 %v44, %v77
  %v81 = vmul.f32 %v77, 0.0
  %85 = vrot.lane.b32.xlu0 %v79, 126
  %v86 = vpop.permute.xlu0 %85
  %87 = vrot.lane.b32.xlu0 %v80, 126
  %v88 = vpop.permute.xlu0 %87
  %89 = vrot.lane.b32.xlu0 %v81, 126
  %v90 = vpop.permute.xlu0 %89
  %vm91 = vcmask 1031168
  %v92 = vsel %vm91, %v86, %v88
  %v93 = vsel %vm91, %v88, %v90
  %v96 = vadd.f32 %v73, %v92
  %v97 = vadd.f32 %v74, %v93
  %98 = vset.pattern.permute.xlu0 3
  %99 = vperm.xlu0 %98, %v14
  %v100 = vpop.permute.xlu0 %99
  %v102 = vmul.f32 %v43, %v100
  %v103 = vmul.f32 %v44, %v100
  %v104 = vmul.f32 %v100, 0.0
  %108 = vrot.lane.b32.xlu0 %v102, 112
  %v109 = vpop.permute.xlu0 %108
  %110 = vrot.lane.b32.xlu0 %v103, 112
  %v111 = vpop.permute.xlu0 %110
  %112 = vrot.lane.b32.xlu0 %v104, 112
  %v113 = vpop.permute.xlu0 %112
  %vm114 = vcmask 916480
  %v115 = vsel %vm114, %v109, %v111
  %v116 = vsel %vm114, %v111, %v113
  %v119 = vadd.f32 %v96, %v115
  %v120 = vadd.f32 %v97, %v116
  %121 = vset.pattern.permute.xlu0 4
  %122 = vperm.xlu0 %121, %v14
  %v123 = vpop.permute.xlu0 %122
  %v125 = vmul.f32 %v43, %v123
  %v126 = vmul.f32 %v44, %v123
  %v127 = vmul.f32 %v123, 0.0
  %131 = vrot.lane.b32.xlu0 %v125, 111
  %v132 = vpop.permute.xlu0 %131
  %133 = vrot.lane.b32.xlu0 %v126, 111
  %v134 = vpop.permute.xlu0 %133
  %135 = vrot.lane.b32.xlu0 %v127, 111
  %v136 = vpop.permute.xlu0 %135
  %vm137 = vcmask 908288
  %v138 = vsel %vm137, %v132, %v134
  %v139 = vsel %vm137, %v134, %v136
  %v142 = vadd.f32 %v119, %v138
  %v143 = vadd.f32 %v120, %v139
  %144 = vset.pattern.permute.xlu0 5
  %145 = vperm.xlu0 %144, %v14
  %v146 = vpop.permute.xlu0 %145
  %v148 = vmul.f32 %v43, %v146
  %v149 = vmul.f32 %v44, %v146
  %v150 = vmul.f32 %v146, 0.0
  %154 = vrot.lane.b32.xlu0 %v148, 110
  %v155 = vpop.permute.xlu0 %154
  %156 = vrot.lane.b32.xlu0 %v149, 110
  %v157 = vpop.permute.xlu0 %156
  %158 = vrot.lane.b32.xlu0 %v150, 110
  %v159 = vpop.permute.xlu0 %158
  %vm160 = vcmask 900096
  %v161 = vsel %vm160, %v155, %v157
  %v162 = vsel %vm160, %v157, %v159
  %v165 = vadd.f32 %v142, %v161
  %v166 = vadd.f32 %v143, %v162
  %167 = vset.pattern.permute.xlu0 6
  %168 = vperm.xlu0 %167, %v14
  %v169 = vpop.permute.xlu0 %168
  %v171 = vmul.f32 %v43, %v169
  %v172 = vmul.f32 %v44, %v169
  %v173 = vmul.f32 %v169, 0.0
  %177 = vrot.lane.b32.xlu0 %v171, 96
  %v178 = vpop.permute.xlu0 %177
  %179 = vrot.lane.b32.xlu0 %v172, 96
  %v180 = vpop.permute.xlu0 %179
  %181 = vrot.lane.b32.xlu0 %v173, 96
  %v182 = vpop.permute.xlu0 %181
  %vm183 = vcmask 785408
  %v184 = vsel %vm183, %v178, %v180
  %v185 = vsel %vm183, %v180, %v182
  %v188 = vadd.f32 %v165, %v184
  %v189 = vadd.f32 %v166, %v185
  %190 = vset.pattern.permute.xlu0 7
  %191 = vperm.xlu0 %190, %v14
  %v192 = vpop.permute.xlu0 %191
  %v194 = vmul.f32 %v43, %v192
  %v195 = vmul.f32 %v44, %v192
  %v196 = vmul.f32 %v192, 0.0
  %200 = vrot.lane.b32.xlu0 %v194, 95
  %v201 = vpop.permute.xlu0 %200
  %202 = vrot.lane.b32.xlu0 %v195, 95
  %v203 = vpop.permute.xlu0 %202
  %204 = vrot.lane.b32.xlu0 %v196, 95
  %v205 = vpop.permute.xlu0 %204
  %vm206 = vcmask 777216
  %v207 = vsel %vm206, %v201, %v203
  %v208 = vsel %vm206, %v203, %v205
  %v211 = vadd.f32 %v188, %v207
  %v212 = vadd.f32 %v189, %v208
  %213 = vset.pattern.permute.xlu0 8
  %214 = vperm.xlu0 %213, %v14
  %v215 = vpop.permute.xlu0 %214
  %v217 = vmul.f32 %v43, %v215
  %v218 = vmul.f32 %v44, %v215
  %v219 = vmul.f32 %v215, 0.0
  %223 = vrot.lane.b32.xlu0 %v217, 94
  %v224 = vpop.permute.xlu0 %223
  %225 = vrot.lane.b32.xlu0 %v218, 94
  %v226 = vpop.permute.xlu0 %225
  %227 = vrot.lane.b32.xlu0 %v219, 94
  %v228 = vpop.permute.xlu0 %227
  %vm229 = vcmask 769024
  %v230 = vsel %vm229, %v224, %v226
  %v231 = vsel %vm229, %v226, %v228
  %v234 = vadd.f32 %v211, %v230
  %v235 = vadd.f32 %v212, %v231
  %s236 = scalar_lea.vmem %s0, 1
  %v237 = vld [vmem:[%s236] ss:$8 sm:$0x3]
  %v239 = vlaneseq
  %v240 = vshrl.u32 %v239, 7
  %v241 = vsub.s32 0, %v240
  %v242 = vrot.slane %v237, %v241
  %v243 = vlaneseq
  %v244 = vshrl.u32 %v243, 7
  %v245 = vsub.s32 1, %v244
  %v246 = vrot.slane %v237, %v245
  %s249 = scalar_lea.vmem %s0, 4
  %v250 = vld [vmem:[%s249] ss:$8 sm:$0x3]
  %v252 = vlaneseq
  %v253 = vshrl.u32 %v252, 7
  %v254 = vsub.s32 0, %v253
  %v255 = vrot.slane %v250, %v254
  %v256 = vlaneseq
  %v257 = vshrl.u32 %v256, 7
  %v258 = vsub.s32 1, %v257
  %v259 = vrot.slane %v250, %v258
  %v262 = vsel %vm42, %v255, %v242
  %v263 = vsel %vm42, %v259, %v246
  %264 = vset.pattern.permute.xlu0 9
  %265 = vperm.xlu0 %264, %v14
  %v266 = vpop.permute.xlu0 %265
  %v268 = vmul.f32 %v262, %v266
  %v269 = vmul.f32 %v263, %v266
  %270 = vset.pattern.permute.xlu0 10
  %271 = vperm.xlu0 %270, %v14
  %v272 = vpop.permute.xlu0 %271
  %v274 = vmul.f32 %v262, %v272
  %v275 = vmul.f32 %v263, %v272
  %v276 = vmul.f32 %v272, 0.0
  %280 = vrot.lane.b32.xlu0 %v274, 127
  %v281 = vpop.permute.xlu0 %280
  %282 = vrot.lane.b32.xlu0 %v275, 127
  %v283 = vpop.permute.xlu0 %282
  %284 = vrot.lane.b32.xlu0 %v276, 127
  %v285 = vpop.permute.xlu0 %284
  %v286 = vsel %vm68, %v281, %v283
  %v287 = vsel %vm68, %v283, %v285
  %v290 = vadd.f32 %v268, %v286
  %v291 = vadd.f32 %v269, %v287
  %292 = vset.pattern.permute.xlu0 11
  %293 = vperm.xlu0 %292, %v14
  %v294 = vpop.permute.xlu0 %293
  %v296 = vmul.f32 %v262, %v294
  %v297 = vmul.f32 %v263, %v294
  %v298 = vmul.f32 %v294, 0.0
  %302 = vrot.lane.b32.xlu0 %v296, 126
  %v303 = vpop.permute.xlu0 %302
  %304 = vrot.lane.b32.xlu0 %v297, 126
  %v305 = vpop.permute.xlu0 %304
  %306 = vrot.lane.b32.xlu0 %v298, 126
  %v307 = vpop.permute.xlu0 %306
  %v308 = vsel %vm91, %v303, %v305
  %v309 = vsel %vm91, %v305, %v307
  %v312 = vadd.f32 %v290, %v308
  %v313 = vadd.f32 %v291, %v309
  %314 = vset.pattern.permute.xlu0 12
  %315 = vperm.xlu0 %314, %v14
  %v316 = vpop.permute.xlu0 %315
  %v318 = vmul.f32 %v262, %v316
  %v319 = vmul.f32 %v263, %v316
  %v320 = vmul.f32 %v316, 0.0
  %324 = vrot.lane.b32.xlu0 %v318, 112
  %v325 = vpop.permute.xlu0 %324
  %326 = vrot.lane.b32.xlu0 %v319, 112
  %v327 = vpop.permute.xlu0 %326
  %328 = vrot.lane.b32.xlu0 %v320, 112
  %v329 = vpop.permute.xlu0 %328
  %v330 = vsel %vm114, %v325, %v327
  %v331 = vsel %vm114, %v327, %v329
  %v334 = vadd.f32 %v312, %v330
  %v335 = vadd.f32 %v313, %v331
  %336 = vset.pattern.permute.xlu0 13
  %337 = vperm.xlu0 %336, %v14
  %v338 = vpop.permute.xlu0 %337
  %v340 = vmul.f32 %v262, %v338
  %v341 = vmul.f32 %v263, %v338
  %v342 = vmul.f32 %v338, 0.0
  %346 = vrot.lane.b32.xlu0 %v340, 111
  %v347 = vpop.permute.xlu0 %346
  %348 = vrot.lane.b32.xlu0 %v341, 111
  %v349 = vpop.permute.xlu0 %348
  %350 = vrot.lane.b32.xlu0 %v342, 111
  %v351 = vpop.permute.xlu0 %350
  %v352 = vsel %vm137, %v347, %v349
  %v353 = vsel %vm137, %v349, %v351
  %v356 = vadd.f32 %v334, %v352
  %v357 = vadd.f32 %v335, %v353
  %358 = vset.pattern.permute.xlu0 14
  %359 = vperm.xlu0 %358, %v14
  %v360 = vpop.permute.xlu0 %359
  %v362 = vmul.f32 %v262, %v360
  %v363 = vmul.f32 %v263, %v360
  %v364 = vmul.f32 %v360, 0.0
  %368 = vrot.lane.b32.xlu0 %v362, 110
  %v369 = vpop.permute.xlu0 %368
  %370 = vrot.lane.b32.xlu0 %v363, 110
  %v371 = vpop.permute.xlu0 %370
  %372 = vrot.lane.b32.xlu0 %v364, 110
  %v373 = vpop.permute.xlu0 %372
  %v374 = vsel %vm160, %v369, %v371
  %v375 = vsel %vm160, %v371, %v373
  %v378 = vadd.f32 %v356, %v374
  %v379 = vadd.f32 %v357, %v375
  %380 = vset.pattern.permute.xlu0 15
  %381 = vperm.xlu0 %380, %v14
  %v382 = vpop.permute.xlu0 %381
  %v384 = vmul.f32 %v262, %v382
  %v385 = vmul.f32 %v263, %v382
  %v386 = vmul.f32 %v382, 0.0
  %390 = vrot.lane.b32.xlu0 %v384, 96
  %v391 = vpop.permute.xlu0 %390
  %392 = vrot.lane.b32.xlu0 %v385, 96
  %v393 = vpop.permute.xlu0 %392
  %394 = vrot.lane.b32.xlu0 %v386, 96
  %v395 = vpop.permute.xlu0 %394
  %v396 = vsel %vm183, %v391, %v393
  %v397 = vsel %vm183, %v393, %v395
  %v400 = vadd.f32 %v378, %v396
  %v401 = vadd.f32 %v379, %v397
  %402 = vset.pattern.permute.xlu0 16
  %403 = vperm.xlu0 %402, %v14
  %v404 = vpop.permute.xlu0 %403
  %v406 = vmul.f32 %v262, %v404
  %v407 = vmul.f32 %v263, %v404
  %v408 = vmul.f32 %v404, 0.0
  %412 = vrot.lane.b32.xlu0 %v406, 95
  %v413 = vpop.permute.xlu0 %412
  %414 = vrot.lane.b32.xlu0 %v407, 95
  %v415 = vpop.permute.xlu0 %414
  %416 = vrot.lane.b32.xlu0 %v408, 95
  %v417 = vpop.permute.xlu0 %416
  %v418 = vsel %vm206, %v413, %v415
  %v419 = vsel %vm206, %v415, %v417
  %v422 = vadd.f32 %v400, %v418
  %v423 = vadd.f32 %v401, %v419
  %424 = vset.pattern.permute.xlu0 17
  %425 = vperm.xlu0 %424, %v14
  %v426 = vpop.permute.xlu0 %425
  %v428 = vmul.f32 %v262, %v426
  %v429 = vmul.f32 %v263, %v426
  %v430 = vmul.f32 %v426, 0.0
  %434 = vrot.lane.b32.xlu0 %v428, 94
  %v435 = vpop.permute.xlu0 %434
  %436 = vrot.lane.b32.xlu0 %v429, 94
  %v437 = vpop.permute.xlu0 %436
  %438 = vrot.lane.b32.xlu0 %v430, 94
  %v439 = vpop.permute.xlu0 %438
  %v440 = vsel %vm229, %v435, %v437
  %v441 = vsel %vm229, %v437, %v439
  %v444 = vadd.f32 %v422, %v440
  %v445 = vadd.f32 %v423, %v441
  %s446 = scalar_lea.vmem %s0, 2
  %v447 = vld [vmem:[%s446] ss:$8 sm:$0x3]
  %v449 = vlaneseq
  %v450 = vshrl.u32 %v449, 7
  %v451 = vsub.s32 0, %v450
  %v452 = vrot.slane %v447, %v451
  %v453 = vlaneseq
  %v454 = vshrl.u32 %v453, 7
  %v455 = vsub.s32 1, %v454
  %v456 = vrot.slane %v447, %v455
  %s459 = scalar_lea.vmem %s0, 5
  %v460 = vld [vmem:[%s459] ss:$8 sm:$0x3]
  %v462 = vlaneseq
  %v463 = vshrl.u32 %v462, 7
  %v464 = vsub.s32 0, %v463
  %v465 = vrot.slane %v460, %v464
  %v466 = vlaneseq
  %v467 = vshrl.u32 %v466, 7
  %v468 = vsub.s32 1, %v467
  %v469 = vrot.slane %v460, %v468
  %v472 = vsel %vm42, %v465, %v452
  %v473 = vsel %vm42, %v469, %v456
  %474 = vset.pattern.permute.xlu0 18
  %475 = vperm.xlu0 %474, %v14
  %v476 = vpop.permute.xlu0 %475
  %v478 = vmul.f32 %v472, %v476
  %v479 = vmul.f32 %v473, %v476
  %480 = vset.pattern.permute.xlu0 19
  %481 = vperm.xlu0 %480, %v14
  %v482 = vpop.permute.xlu0 %481
  %v484 = vmul.f32 %v472, %v482
  %v485 = vmul.f32 %v473, %v482
  %v486 = vmul.f32 %v482, 0.0
  %490 = vrot.lane.b32.xlu0 %v484, 127
  %v491 = vpop.permute.xlu0 %490
  %492 = vrot.lane.b32.xlu0 %v485, 127
  %v493 = vpop.permute.xlu0 %492
  %494 = vrot.lane.b32.xlu0 %v486, 127
  %v495 = vpop.permute.xlu0 %494
  %v496 = vsel %vm68, %v491, %v493
  %v497 = vsel %vm68, %v493, %v495
  %v500 = vadd.f32 %v478, %v496
  %v501 = vadd.f32 %v479, %v497
  %502 = vset.pattern.permute.xlu0 20
  %503 = vperm.xlu0 %502, %v14
  %v504 = vpop.permute.xlu0 %503
  %v506 = vmul.f32 %v472, %v504
  %v507 = vmul.f32 %v473, %v504
  %v508 = vmul.f32 %v504, 0.0
  %512 = vrot.lane.b32.xlu0 %v506, 126
  %v513 = vpop.permute.xlu0 %512
  %514 = vrot.lane.b32.xlu0 %v507, 126
  %v515 = vpop.permute.xlu0 %514
  %516 = vrot.lane.b32.xlu0 %v508, 126
  %v517 = vpop.permute.xlu0 %516
  %v518 = vsel %vm91, %v513, %v515
  %v519 = vsel %vm91, %v515, %v517
  %v522 = vadd.f32 %v500, %v518
  %v523 = vadd.f32 %v501, %v519
  %524 = vset.pattern.permute.xlu0 21
  %525 = vperm.xlu0 %524, %v14
  %v526 = vpop.permute.xlu0 %525
  %v528 = vmul.f32 %v472, %v526
  %v529 = vmul.f32 %v473, %v526
  %v530 = vmul.f32 %v526, 0.0
  %534 = vrot.lane.b32.xlu0 %v528, 112
  %v535 = vpop.permute.xlu0 %534
  %536 = vrot.lane.b32.xlu0 %v529, 112
  %v537 = vpop.permute.xlu0 %536
  %538 = vrot.lane.b32.xlu0 %v530, 112
  %v539 = vpop.permute.xlu0 %538
  %v540 = vsel %vm114, %v535, %v537
  %v541 = vsel %vm114, %v537, %v539
  %v544 = vadd.f32 %v522, %v540
  %v545 = vadd.f32 %v523, %v541
  %546 = vset.pattern.permute.xlu0 22
  %547 = vperm.xlu0 %546, %v14
  %v548 = vpop.permute.xlu0 %547
  %v550 = vmul.f32 %v472, %v548
  %v551 = vmul.f32 %v473, %v548
  %v552 = vmul.f32 %v548, 0.0
  %556 = vrot.lane.b32.xlu0 %v550, 111
  %v557 = vpop.permute.xlu0 %556
  %558 = vrot.lane.b32.xlu0 %v551, 111
  %v559 = vpop.permute.xlu0 %558
  %560 = vrot.lane.b32.xlu0 %v552, 111
  %v561 = vpop.permute.xlu0 %560
  %v562 = vsel %vm137, %v557, %v559
  %v563 = vsel %vm137, %v559, %v561
  %v566 = vadd.f32 %v544, %v562
  %v567 = vadd.f32 %v545, %v563
  %568 = vset.pattern.permute.xlu0 23
  %569 = vperm.xlu0 %568, %v14
  %v570 = vpop.permute.xlu0 %569
  %v572 = vmul.f32 %v472, %v570
  %v573 = vmul.f32 %v473, %v570
  %v574 = vmul.f32 %v570, 0.0
  %578 = vrot.lane.b32.xlu0 %v572, 110
  %v579 = vpop.permute.xlu0 %578
  %580 = vrot.lane.b32.xlu0 %v573, 110
  %v581 = vpop.permute.xlu0 %580
  %582 = vrot.lane.b32.xlu0 %v574, 110
  %v583 = vpop.permute.xlu0 %582
  %v584 = vsel %vm160, %v579, %v581
  %v585 = vsel %vm160, %v581, %v583
  %v588 = vadd.f32 %v566, %v584
  %v589 = vadd.f32 %v567, %v585
  %590 = vset.pattern.permute.xlu0 24
  %591 = vperm.xlu0 %590, %v14
  %v592 = vpop.permute.xlu0 %591
  %v594 = vmul.f32 %v472, %v592
  %v595 = vmul.f32 %v473, %v592
  %v596 = vmul.f32 %v592, 0.0
  %600 = vrot.lane.b32.xlu0 %v594, 96
  %v601 = vpop.permute.xlu0 %600
  %602 = vrot.lane.b32.xlu0 %v595, 96
  %v603 = vpop.permute.xlu0 %602
  %604 = vrot.lane.b32.xlu0 %v596, 96
  %v605 = vpop.permute.xlu0 %604
  %v606 = vsel %vm183, %v601, %v603
  %v607 = vsel %vm183, %v603, %v605
  %v610 = vadd.f32 %v588, %v606
  %v611 = vadd.f32 %v589, %v607
  %612 = vset.pattern.permute.xlu0 25
  %613 = vperm.xlu0 %612, %v14
  %v614 = vpop.permute.xlu0 %613
  %v616 = vmul.f32 %v472, %v614
  %v617 = vmul.f32 %v473, %v614
  %v618 = vmul.f32 %v614, 0.0
  %622 = vrot.lane.b32.xlu0 %v616, 95
  %v623 = vpop.permute.xlu0 %622
  %624 = vrot.lane.b32.xlu0 %v617, 95
  %v625 = vpop.permute.xlu0 %624
  %626 = vrot.lane.b32.xlu0 %v618, 95
  %v627 = vpop.permute.xlu0 %626
  %v628 = vsel %vm206, %v623, %v625
  %v629 = vsel %vm206, %v625, %v627
  %v632 = vadd.f32 %v610, %v628
  %v633 = vadd.f32 %v611, %v629
  %634 = vset.pattern.permute.xlu0 26
  %635 = vperm.xlu0 %634, %v14
  %v636 = vpop.permute.xlu0 %635
  %v638 = vmul.f32 %v472, %v636
  %v639 = vmul.f32 %v473, %v636
  %v640 = vmul.f32 %v636, 0.0
  %644 = vrot.lane.b32.xlu0 %v638, 94
  %v645 = vpop.permute.xlu0 %644
  %646 = vrot.lane.b32.xlu0 %v639, 94
  %v647 = vpop.permute.xlu0 %646
  %648 = vrot.lane.b32.xlu0 %v640, 94
  %v649 = vpop.permute.xlu0 %648
  %v650 = vsel %vm229, %v645, %v647
  %v651 = vsel %vm229, %v647, %v649
  %v654 = vadd.f32 %v632, %v650
  %v655 = vadd.f32 %v633, %v651
  %v656 = vadd.f32 %v234, %v444
  %v657 = vadd.f32 %v235, %v445
  %v658 = vadd.f32 %v656, %v654
  %v659 = vadd.f32 %v657, %v655
  %v660 = vld [vmem:[%s2] sm:$0x3f]
  %662 = vset.pattern.permute.xlu0 0
  %663 = vperm.xlu0 %662, %v660
  %v664 = vpop.permute.xlu0 %663
  %v666 = vadd.f32 %v658, %v664
  %v667 = vadd.f32 %v659, %v664
  %668 = vst [vmem:[%s3] sm:$0x3f] %v666
  %669 = vst [vmem:[%s3 + $0x8] sm:$0x3f] %v667
  // Predicated region
  $region14: #{conv2d_3x3_pallas.1} parent=0 // pred_check
    _
  $region15: #{conv2d_3x3_pallas.1} parent=0 // pred_check_branch
    %671 = sbr.rel (0) target = $region17
  $region16: #{conv2d_3x3_pallas.1} parent=0 // pred_region
    _
  $region17: #{conv2d_3x3_pallas.1} parent=0 // pred_fallthru
    _
  // Predicated region
  $region18: #{conv2d_3x3_pallas.1} parent=0 // pred_check
    _
  $region19: #{conv2d_3x3_pallas.1} parent=0 // pred_check_branch
    %673 = sbr.rel (0) target = $region21
  $region20: #{conv2d_3x3_pallas.1} parent=0 // pred_region
    _
  $region21: #{conv2d_3x3_pallas.1} parent=0 // pred_fallthru
    _

</llo_original>
